<compile_context>
chip_gen: v5e
topology: v5e:2x2
jax: 0.10.0
libtpu: 0.0.40
codegen_flags: <defaults>
</compile_context>

<pallas_src>
import math

import jax
import jax.numpy as jnp
from jax.experimental import pallas as pl
from jax.experimental.pallas import tpu as pltpu


def _copy_kernel(x_ref, o_ref):
    # Pure streaming identity copy; the flatten is metadata in the wrapper.
    o_ref[...] = x_ref[...]


def _pick_lane_width(n):
    """Largest lane width (multiple of 128) dividing n; prefer one that keeps
    rows = n // lanes a multiple of 8 (sublane-dense)."""
    best = None
    for lanes in (2048, 1024, 512, 256, 128):
        if n % lanes != 0:
            continue
        if (n // lanes) % 8 == 0:
            return lanes
        if best is None:
            best = lanes
    return best


def _vmem_budget():
    """(vmem_limit_bytes, per-tile byte budget) tuned per TPU generation."""
    try:
        cap = pltpu.get_tpu_info().vmem_capacity_bytes
    except Exception:
        cap = 64 * 1024 * 1024  # conservative default (v7x per-TC)
    if cap <= 64 * 1024 * 1024:           # v7x: 64 MiB physical per TC
        return 48 * 1024 * 1024, 8 * 1024 * 1024
    # v5e / v6e: 128 MiB physical; raise scoped limit past the 16/32 MiB default.
    return 64 * 1024 * 1024, 8 * 1024 * 1024


def _pick_row_tile(rows, lanes, itemsize, tile_budget_bytes):
    """Largest multiple-of-8 row tile within the VMEM budget; last grid block
    may be ragged (Pallas masks it).  Keeps >= 2 blocks when rows allow so
    v7x megacore can shard the 'parallel' axis."""
    if rows < 8:
        return rows  # full extent (tiny input); block == full array dims
    budget_rows = max(8, tile_budget_bytes // (lanes * itemsize))
    tile_r = min(rows, budget_rows)
    tile_r = max(8, (tile_r // 8) * 8)
    if pl.cdiv(rows, tile_r) < 2 and rows >= 16:
        half = (rows + 1) // 2
        tile_r = ((half + 7) // 8) * 8  # exactly 2 blocks, multiple of 8
    return tile_r


def pallas_flatten(x: jax.Array) -> jax.Array:
    """Flatten x (B, ...) -> (B, prod(rest)); Pallas copy on a lane-dense view."""
    b = x.shape[0]
    flat = math.prod(x.shape[1:]) if x.ndim > 1 else 1
    n = b * flat
    itemsize = jnp.dtype(x.dtype).itemsize

    if n == 0:
        return jnp.reshape(x, (b, flat))

    lanes = _pick_lane_width(n)
    if lanes is None:
        # Element count not a multiple of 128: flatten is pure metadata, so
        # return the free reshape instead of an untileable single-block copy.
        return jnp.reshape(x, (b, flat))

    rows = n // lanes
    vmem_limit, tile_budget = _vmem_budget()
    tile_r = _pick_row_tile(rows, lanes, itemsize, tile_budget)

    # Metadata-only reshape of the contiguous row-major input.
    x2d = jnp.reshape(x, (rows, lanes))

    y2d = pl.pallas_call(
        _copy_kernel,
        out_shape=jax.ShapeDtypeStruct((rows, lanes), x.dtype),
        grid=(pl.cdiv(rows, tile_r),),
        in_specs=[pl.BlockSpec((tile_r, lanes), lambda i: (i, 0))],
        out_specs=pl.BlockSpec((tile_r, lanes), lambda i: (i, 0)),
        compiler_params=pltpu.CompilerParams(
            dimension_semantics=("parallel",),
            vmem_limit_bytes=vmem_limit,
        ),
        cost_estimate=pl.CostEstimate(
            flops=0, transcendentals=0, bytes_accessed=2 * n * itemsize
        ),
    )(x2d)

    # Metadata-only reshape back to the flattened (B, -1) view.
    return jnp.reshape(y2d, (b, flat))


if __name__ == "__main__":
    key = jax.random.PRNGKey(0)
    B, C, H, W = 2, 4, 16, 16
    x = jax.random.normal(key, (B, C, H, W), dtype=jnp.float32)

    y = pallas_flatten(x)
    y = jax.block_until_ready(y)

    # Reference: torch's x.view(B, -1) on contiguous NCHW == row-major reshape.
    y_ref = jnp.reshape(x, (B, -1))

    assert y.shape == (B, C * H * W), f"bad shape {y.shape}"
    assert y.dtype == x.dtype, f"bad dtype {y.dtype}"
    assert jnp.array_equal(y, y_ref), "mismatch vs reference flatten"

    print("KERNEL_OK")
</pallas_src>

<mosaic_0001>
module attributes {stable_mosaic.version = 11 : i64} {
  func.func @_copy_kernel(%arg0: i32, %arg1: memref<8x256xf32, #tpu.memory_space<vmem>>, %arg2: memref<8x256xf32, #tpu.memory_space<vmem>>) attributes {dimension_semantics = [#tpu.dimension_semantics<parallel>], iteration_bounds = array<i64: 1>, scalar_prefetch = 0 : i64, scratch_operands = 0 : i64, tpu.core_type = #tpu.core_type<tc>, window_params = [{transform_indices = @transform_0, window_bounds = array<i64: 8, 256>}, {transform_indices = @transform_1, window_bounds = array<i64: 8, 256>}]} {
    %c0 = arith.constant 0 : index
    %c0_0 = arith.constant 0 : index
    %0 = vector.load %arg1[%c0, %c0_0] : memref<8x256xf32, #tpu.memory_space<vmem>>, vector<8x256xf32>
    %c0_1 = arith.constant 0 : index
    %c0_2 = arith.constant 0 : index
    %1 = vector.load %arg2[%c0_1, %c0_2] : memref<8x256xf32, #tpu.memory_space<vmem>>, vector<8x256xf32>
    tpu.vector_store %arg2[%c0_1, %c0_2], %0 {strides = array<i32>} : memref<8x256xf32, #tpu.memory_space<vmem>>, vector<8x256xf32>,
    return
  }
  func.func @transform_0(%arg0: i32) -> (i32, i32) {
    %c0_i32 = arith.constant 0 : i32
    %c0_i32_0 = arith.constant 0 : i32
    return %arg0, %c0_i32 : i32, i32
  }
  func.func @transform_1(%arg0: i32) -> (i32, i32) {
    %c0_i32 = arith.constant 0 : i32
    %c0_i32_0 = arith.constant 0 : i32
    return %arg0, %c0_i32 : i32, i32
  }
}

</mosaic_0001>

<llo_original>
// kernel: tpu_custom_call.1
$region0: #{tpu_custom_call.1}
  #allocation0 [shape = 'u32[]', space=smem, size = 0x4, offset = 0x4, fixed_abs, tag = 'smem constant byte address 0x4 - core index']
  #allocation1 [shape = 'u32[72,128]{1,0:T(1,128)}', space=vmem, size = 0x9000, scoped, tag = 'internal scratch']
  %s0 = inlined_call_operand.hbm [shape: f32[8,256], index: 0, kind: input, shape index: {}]
  %s1 = inlined_call_operand.hbm [shape: f32[8,256], index: 1, kind: output, shape index: {}]
  %s2 = sld [smem:[#allocation0]]
  $region18: #{tpu_custom_call.1} parent=0
    _
  %s4 = ssub.s32 1, %s2
  %s5 = scalar_select 0, %s4, %s2
  $region1: #{tpu_custom_call.1} parent=0
    #allocation2 [shape = 'u8[8192]{0}', space=vmem, size = 0x2000, scoped, tag = 'input window, operand 0, single buffered']
    #allocation3 [shape = 's32[1]{0}', space=sflag, size = 0x4, scoped, tag = 'scoped memory for tpu_custom_call.1']
    #allocation4 [shape = 's32[1]{0}', space=sflag, size = 0x4, scoped, tag = 'scoped memory for tpu_custom_call.1']
    #allocation5 [shape = 'u8[8192]{0}', space=vmem, size = 0x2000, scoped, tag = 'output window, operand 0, single buffered']
    %6 = vsyncpa [#allocation3], 0
    %7 = vsyncpa [#allocation4], 0
    // Predicated region
    $region2: #{tpu_custom_call.1} parent=1 // pred_check
      _
    $region3: #{tpu_custom_call.1} parent=1 // pred_check_branch
      %9 = sbr.rel (0) target = $region5
    $region4: #{tpu_custom_call.1} parent=1 // pred_region
      %11 = vsyncadd [#allocation3], 0
      %s13 = sshll.u32 %s0, 4
      %s14 = int_to_ptr.hbm [resolvable:$true] %s13
      %s15 = sshll.u32 [#allocation2], 4
      %s16 = int_to_ptr.vmem [resolvable:$true] %s15
      %18 = dma.hbm_to_vmem [thread:$0]  %s14, 256, %s16, [#allocation3]
    $region5: #{tpu_custom_call.1} parent=1 // pred_fallthru
      _
    // Predicated region
    $region6: #{tpu_custom_call.1} parent=1 // pred_check
      _
    $region7: #{tpu_custom_call.1} parent=1 // pred_check_branch
      %20 = sbr.rel (0) target = $region9
    $region8: #{tpu_custom_call.1} parent=1 // pred_region
      %22 = dma.done [#allocation3], 256
    $region9: #{tpu_custom_call.1} parent=1 // pred_fallthru
      _
    %v23 = vld [vmem:[#allocation2] sm:$0xff]
    %v24 = vld [vmem:[#allocation2 + $0x8] sm:$0xff]
    %25 = vst [vmem:[#allocation5] sm:$0xff] %v23
    %26 = vst [vmem:[#allocation5 + $0x8] sm:$0xff] %v24
    // Predicated region
    $region10: #{tpu_custom_call.1} parent=1 // pred_check
      _
    $region11: #{tpu_custom_call.1} parent=1 // pred_check_branch
      %28 = sbr.rel (0) target = $region13
    $region12: #{tpu_custom_call.1} parent=1 // pred_region
      %30 = vsyncadd [#allocation4], 0
      %s32 = sshll.u32 [#allocation5], 4
      %s33 = int_to_ptr.vmem [resolvable:$true] %s32
      %s34 = sshll.u32 %s1, 4
      %s35 = int_to_ptr.hbm [resolvable:$true] %s34
      %37 = dma.vmem_to_hbm [thread:$0]  %s33, 256, %s35, [#allocation4]
    $region13: #{tpu_custom_call.1} parent=1 // pred_fallthru
      _
    // Predicated region
    $region14: #{tpu_custom_call.1} parent=1 // pred_check
      _
    $region15: #{tpu_custom_call.1} parent=1 // pred_check_branch
      %39 = sbr.rel (0) target = $region17
    $region16: #{tpu_custom_call.1} parent=1 // pred_region
      %41 = dma.done [#allocation4], 256
    $region17: #{tpu_custom_call.1} parent=1 // pred_fallthru
      _
    %42 = vsyncpa [#allocation3], 1
    %43 = vsyncpa [#allocation4], 1

</llo_original>
